<compile_context>
chip_gen: v7x
topology: tpu7x:2x2x1
jax: 0.10.0
libtpu: 0.0.40
codegen_flags: <defaults>
</compile_context>

<pallas_src>
import jax
import jax.numpy as jnp
import numpy as np
from jax.experimental import pallas as pl
from jax.experimental.pallas import tpu as pltpu


def _cdiv(a, b):
    return -(-a // b)


def _round_up(x, m):
    return _cdiv(x, m) * m


def _make_fused_mlp_kernel(num_layers, negative_slope=0.01):
    """h = leaky_relu(h @ W_l + b_l) for l = 0..num_layers-1, fused in one kernel."""

    def kernel(*refs):
        # refs = (x_ref, w0_ref, b0_ref, w1_ref, b1_ref, ..., o_ref)
        x_ref = refs[0]
        o_ref = refs[-1]
        h = x_ref[...]                                   # (tile_b, D0), caller dtype
        for l in range(num_layers):
            w = refs[1 + 2 * l][...]                     # (D_l, D_{l+1}), compute dtype
            b = refs[2 + 2 * l][...]                     # (1, D_{l+1}), f32
            # MXU matmul: operands in the weight dtype, f32 accumulation.
            y = jnp.dot(h.astype(w.dtype), w, preferred_element_type=jnp.float32)
            y = y + b                                    # f32 bias add (broadcast)
            h = jnp.where(y > 0, y, negative_slope * y)  # f32 leaky_relu (VPU)
        o_ref[...] = h.astype(o_ref.dtype)

    return kernel


def fused_mlp_forward(x, weights, biases, tile_b, out_dtype):
    """x: (B, D0) with B % tile_b == 0 (or tile_b == B).
    weights[l]: (D_l, D_{l+1}) in compute dtype.  biases[l]: (1, D_{l+1}) f32."""
    B, D0 = x.shape
    num_layers = len(weights)
    d_out = weights[-1].shape[1]
    grid = (B // tile_b,)

    # Feature dims are passed at their true width (block dim == full array dim
    # is always legal).  The kernel is HBM-bandwidth bound at these widths, so
    # MXU fill is not the constraint.
    # TODO(synk): if hidden widths ever grow past ~2048, tile the output
    # feature dim with an extra grid axis (and use 256-alignment on v6e/v7x)
    # instead of keeping whole weights VMEM-resident.
    in_specs = [pl.BlockSpec((tile_b, D0), lambda i: (i, 0))]
    operands = [x]
    for w, b in zip(weights, biases):
        # Constant index_map -> weights/biases are DMA'd once and stay
        # VMEM-resident across all batch tiles (no per-tile refetch).
        in_specs.append(pl.BlockSpec(w.shape, lambda i: (0, 0)))
        in_specs.append(pl.BlockSpec(b.shape, lambda i: (0, 0)))
        operands.append(w)
        operands.append(b)

    return pl.pallas_call(
        _make_fused_mlp_kernel(num_layers),
        out_shape=jax.ShapeDtypeStruct((B, d_out), out_dtype),
        grid=grid,
        in_specs=in_specs,
        out_specs=pl.BlockSpec((tile_b, d_out), lambda i: (i, 0)),
        compiler_params=pltpu.CompilerParams(
            # Batch tiles are independent -> shard across TensorCores on v7x.
            dimension_semantics=("parallel",)),
    )(*operands)


def orthogonal_init(key, rows, cols, w_scale=1.0):
    """Mimic torch.nn.init.orthogonal_ for a weight of shape (rows, cols)."""
    flat = jax.random.normal(key, (rows, cols), dtype=jnp.float32)
    if rows < cols:
        flat = flat.T
    q, r = jnp.linalg.qr(flat)
    d = jnp.sign(jnp.diagonal(r))
    q = q * d[None, :]
    if rows < cols:
        q = q.T
    return (q * w_scale).astype(jnp.float32)


class FCBodyPallas:
    """JAX/Pallas re-implementation of FCBody.forward as a single fused kernel."""

    def __init__(self, state_dim, hidden_units=(64, 64), w_scale=1.0, seed=0,
                 compute_dtype=jnp.bfloat16, out_dtype=None, max_tile_rows=512):
        self.state_dim = state_dim
        self.hidden_units = tuple(hidden_units)
        self.compute_dtype = compute_dtype
        self.out_dtype = compute_dtype if out_dtype is None else out_dtype
        self.max_tile_rows = max_tile_rows

        self.weights_f32 = []   # (in, out) layout (= torch weight.T), f32 reference
        self.biases_f32 = []
        self.weights = []       # (in, out), compute_dtype (MXU operands)
        self.biases = []        # (1, out), f32

        if len(self.hidden_units) == 0:
            self.feature_dim = state_dim
            return

        dims = (state_dim,) + self.hidden_units
        self.feature_dim = dims[-1]

        key = jax.random.PRNGKey(seed)
        for din, dout in zip(dims[:-1], dims[1:]):
            key, sub = jax.random.split(key)
            w_torch = orthogonal_init(sub, dout, din, w_scale)   # (out, in), orthogonal
            w = jnp.asarray(w_torch.T)                           # (in, out)
            b = jnp.zeros((dout,), dtype=jnp.float32)            # init.constant_(0)
            self.weights_f32.append(w)
            self.biases_f32.append(b)
            self.weights.append(w.astype(compute_dtype))
            self.biases.append(b.reshape(1, dout))

    def __call__(self, x):
        if not self.weights:
            return x
        B = x.shape[0]
        # bf16 activations pack 16 rows per vreg; f32 packs 8.
        row_align = 16 if self.compute_dtype == jnp.bfloat16 else 8

        # Pick the number of batch tiles: big tiles (<= max_tile_rows) amortize
        # the ~0.35us per-grid-step overhead; force >=2 tiles when the batch is
        # large enough so the "parallel" axis actually uses both v7x cores.
        n_tiles = _cdiv(B, self.max_tile_rows)
        if n_tiles < 2 and B >= 2 * row_align:
            n_tiles = 2

        if n_tiles <= 1:
            # Single ragged tile: block rows == full array dim is legal, so the
            # common small-B inference shape needs no padding and no slicing.
            tile_b, B_pad = B, B
        else:
            tile_b = _round_up(_cdiv(B, n_tiles), row_align)
            B_pad = tile_b * n_tiles

        if B_pad == B:
            x_in = x
        else:
            # Minimal batch-only padding (< n_tiles * row_align extra rows),
            # at the true feature width.
            x_in = jnp.zeros((B_pad, x.shape[1]), x.dtype).at[:B].set(x)

        out = fused_mlp_forward(x_in, self.weights, self.biases, tile_b,
                                self.out_dtype)
        return out if B_pad == B else out[:B]


if __name__ == "__main__":
    # Small, deterministic shapes matching the module: batch=8, state_dim=16,
    # hidden=(64, 64).
    batch, state_dim = 8, 16
    hidden_units = (64, 64)

    key = jax.random.PRNGKey(0)
    x = jax.random.normal(key, (batch, state_dim), dtype=jnp.float32)

    def reference(xv, m):
        h = xv
        for w, b in zip(m.weights_f32, m.biases_f32):
            y = h @ w + b
            h = jnp.where(y > 0, y, 0.01 * y)   # F.leaky_relu default slope
        return h

    # Production configuration: bf16 MXU operands + bf16 output, f32 accumulate.
    model = FCBodyPallas(state_dim, hidden_units=hidden_units, seed=0,
                         compute_dtype=jnp.bfloat16)
    out = jax.block_until_ready(model(x))
    assert out.shape == (batch, model.feature_dim)

    ref = reference(x, model)
    # bf16 operands + bf16 output -> loose tolerance vs the f32 reference.
    np.testing.assert_allclose(np.asarray(out, dtype=np.float32), np.asarray(ref),
                               rtol=3e-2, atol=3e-2)

    # Same fused kernel with f32 operands must match the reference tightly.
    model_f32 = FCBodyPallas(state_dim, hidden_units=hidden_units, seed=0,
                             compute_dtype=jnp.float32)
    out_f32 = jax.block_until_ready(model_f32(x))
    np.testing.assert_allclose(np.asarray(out_f32), np.asarray(ref),
                               rtol=1e-5, atol=1e-5)

    # Ragged batch: exercises the multi-tile grid + minimal batch padding path.
    x_big = jax.random.normal(jax.random.PRNGKey(1), (40, state_dim),
                              dtype=jnp.float32)
    out_big = jax.block_until_ready(model_f32(x_big))
    assert out_big.shape == (40, model_f32.feature_dim)
    ref_big = reference(x_big, model_f32)
    np.testing.assert_allclose(np.asarray(out_big), np.asarray(ref_big),
                               rtol=1e-5, atol=1e-5)

    print("KERNEL_OK")
</pallas_src>

<mosaic_0001>
module attributes {stable_mosaic.version = 11 : i64} {
  func.func @kernel(%arg0: i32, %arg1: memref<8x16xf32, #tpu.memory_space<vmem>>, %arg2: memref<16x64xbf16, #tpu.memory_space<vmem>>, %arg3: memref<1x64xf32, #tpu.memory_space<vmem>>, %arg4: memref<64x64xbf16, #tpu.memory_space<vmem>>, %arg5: memref<1x64xf32, #tpu.memory_space<vmem>>, %arg6: memref<8x64xbf16, #tpu.memory_space<vmem>>) attributes {dimension_semantics = [#tpu.dimension_semantics<parallel>], iteration_bounds = array<i64: 1>, scalar_prefetch = 0 : i64, scratch_operands = 0 : i64, tpu.core_type = #tpu.core_type<tc>, window_params = [{transform_indices = @transform_0, window_bounds = array<i64: 8, 16>}, {pipeline_mode = #tpu.pipeline_mode<synchronous>, transform_indices = @transform_1, window_bounds = array<i64: 16, 64>}, {pipeline_mode = #tpu.pipeline_mode<synchronous>, transform_indices = @transform_2, window_bounds = array<i64: 1, 64>}, {pipeline_mode = #tpu.pipeline_mode<synchronous>, transform_indices = @transform_3, window_bounds = array<i64: 64, 64>}, {pipeline_mode = #tpu.pipeline_mode<synchronous>, transform_indices = @transform_4, window_bounds = array<i64: 1, 64>}, {transform_indices = @transform_5, window_bounds = array<i64: 8, 64>}]} {
    %c0 = arith.constant 0 : index
    %c0_0 = arith.constant 0 : index
    %0 = vector.load %arg1[%c0, %c0_0] : memref<8x16xf32, #tpu.memory_space<vmem>>, vector<8x16xf32>
    %c0_1 = arith.constant 0 : index
    %c0_2 = arith.constant 0 : index
    %1 = vector.load %arg2[%c0_1, %c0_2] : memref<16x64xbf16, #tpu.memory_space<vmem>>, vector<16x64xbf16>
    %c0_3 = arith.constant 0 : index
    %c0_4 = arith.constant 0 : index
    %2 = vector.load %arg3[%c0_3, %c0_4] : memref<1x64xf32, #tpu.memory_space<vmem>>, vector<1x64xf32>
    %3 = arith.truncf %0 : vector<8x16xf32> to vector<8x16xbf16>
    %cst = arith.constant dense<0.000000e+00> : vector<8x64xf32>
    %4 = tpu.matmul %3, %1, %cst {dimension_numbers = #tpu.dot_dimension_numbers<[1], [0], [0], [1], [0, 0, 1, 1], [], []>} : vector<8x16xbf16>, vector<16x64xbf16>, vector<8x64xf32> -> vector<8x64xf32>
    %5 = vector.broadcast %2 : vector<1x64xf32> to vector<8x64xf32>
    %6 = arith.addf %4, %5 : vector<8x64xf32>
    %cst_5 = arith.constant 0.000000e+00 : f32
    %7 = vector.broadcast %cst_5 : f32 to vector<8x64xf32>
    %8 = arith.cmpf ogt, %6, %7 : vector<8x64xf32>
    %cst_6 = arith.constant 0.00999999977 : f32
    %9 = vector.broadcast %cst_6 : f32 to vector<8x64xf32>
    %10 = arith.mulf %9, %6 : vector<8x64xf32>
    %11 = arith.select %8, %6, %10 : vector<8x64xi1>, vector<8x64xf32>
    %c0_7 = arith.constant 0 : index
    %c0_8 = arith.constant 0 : index
    %12 = vector.load %arg4[%c0_7, %c0_8] : memref<64x64xbf16, #tpu.memory_space<vmem>>, vector<64x64xbf16>
    %c0_9 = arith.constant 0 : index
    %c0_10 = arith.constant 0 : index
    %13 = vector.load %arg5[%c0_9, %c0_10] : memref<1x64xf32, #tpu.memory_space<vmem>>, vector<1x64xf32>
    %14 = arith.truncf %11 : vector<8x64xf32> to vector<8x64xbf16>
    %cst_11 = arith.constant dense<0.000000e+00> : vector<8x64xf32>
    %15 = tpu.matmul %14, %12, %cst_11 {dimension_numbers = #tpu.dot_dimension_numbers<[1], [0], [0], [1], [0, 0, 1, 1], [], []>} : vector<8x64xbf16>, vector<64x64xbf16>, vector<8x64xf32> -> vector<8x64xf32>
    %16 = vector.broadcast %13 : vector<1x64xf32> to vector<8x64xf32>
    %17 = arith.addf %15, %16 : vector<8x64xf32>
    %cst_12 = arith.constant 0.000000e+00 : f32
    %18 = vector.broadcast %cst_12 : f32 to vector<8x64xf32>
    %19 = arith.cmpf ogt, %17, %18 : vector<8x64xf32>
    %cst_13 = arith.constant 0.00999999977 : f32
    %20 = vector.broadcast %cst_13 : f32 to vector<8x64xf32>
    %21 = arith.mulf %20, %17 : vector<8x64xf32>
    %22 = arith.select %19, %17, %21 : vector<8x64xi1>, vector<8x64xf32>
    %23 = arith.truncf %22 : vector<8x64xf32> to vector<8x64xbf16>
    %c0_14 = arith.constant 0 : index
    %c0_15 = arith.constant 0 : index
    %24 = vector.load %arg6[%c0_14, %c0_15] : memref<8x64xbf16, #tpu.memory_space<vmem>>, vector<8x64xbf16>
    tpu.vector_store %arg6[%c0_14, %c0_15], %23 {strides = array<i32>} : memref<8x64xbf16, #tpu.memory_space<vmem>>, vector<8x64xbf16>,
    return
  }
  func.func @transform_0(%arg0: i32) -> (i32, i32) {
    %c0_i32 = arith.constant 0 : i32
    %c0_i32_0 = arith.constant 0 : i32
    return %arg0, %c0_i32 : i32, i32
  }
  func.func @transform_1(%arg0: i32) -> (i32, i32) {
    %c0_i32 = arith.constant 0 : i32
    %c0_i32_0 = arith.constant 0 : i32
    %c0_i32_1 = arith.constant 0 : i32
    return %c0_i32, %c0_i32_0 : i32, i32
  }
  func.func @transform_2(%arg0: i32) -> (i32, i32) {
    %c0_i32 = arith.constant 0 : i32
    %c0_i32_0 = arith.constant 0 : i32
    %c0_i32_1 = arith.constant 0 : i32
    return %c0_i32, %c0_i32_0 : i32, i32
  }
  func.func @transform_3(%arg0: i32) -> (i32, i32) {
    %c0_i32 = arith.constant 0 : i32
    %c0_i32_0 = arith.constant 0 : i32
    %c0_i32_1 = arith.constant 0 : i32
    return %c0_i32, %c0_i32_0 : i32, i32
  }
  func.func @transform_4(%arg0: i32) -> (i32, i32) {
    %c0_i32 = arith.constant 0 : i32
    %c0_i32_0 = arith.constant 0 : i32
    %c0_i32_1 = arith.constant 0 : i32
    return %c0_i32, %c0_i32_0 : i32, i32
  }
  func.func @transform_5(%arg0: i32) -> (i32, i32) {
    %c0_i32 = arith.constant 0 : i32
    %c0_i32_0 = arith.constant 0 : i32
    return %arg0, %c0_i32 : i32, i32
  }
}

</mosaic_0001>

<llo_original>
// kernel: tpu_custom_call.1
$region0: #{tpu_custom_call.1}
  #allocation0 [shape = 'u32[]', space=smem, size = 0x4, offset = 0x4, fixed_abs, tag = 'smem constant byte address 0x4 - core index']
  #allocation1 [shape = 'u32[144,128]{1,0:T(1,128)}', space=vmem, size = 0x12000, scoped, tag = 'internal scratch']
  %s0 = inlined_call_operand.hbm [shape: f32[8,16], index: 0, kind: input, shape index: {}]
  %s1 = inlined_call_operand.hbm [shape: bf16[16,64], index: 1, kind: input, shape index: {}]
  %s2 = inlined_call_operand.vmem [shape: f32[1,64], index: 2, kind: input, shape index: {}]
  %s3 = inlined_call_operand.hbm [shape: bf16[64,64], index: 3, kind: input, shape index: {}]
  %s4 = inlined_call_operand.vmem [shape: f32[1,64], index: 4, kind: input, shape index: {}]
  %s5 = inlined_call_operand.hbm [shape: bf16[8,64], index: 5, kind: output, shape index: {}]
  %s6 = sld [smem:[#allocation0]]
  $region42: #{tpu_custom_call.1} parent=0
    _
  %s8 = ssub.s32 1, %s6
  %s9 = scalar_select 0, %s8, %s6
  $region1: #{tpu_custom_call.1} parent=0
    #allocation2 [shape = 'u8[4096]{0}', space=vmem, size = 0x1000, scoped, tag = 'input window, operand 0, single buffered']
    #allocation3 [shape = 's32[1]{0}', space=sflag, size = 0x4, scoped, tag = 'scoped memory for tpu_custom_call.1']
    #allocation4 [shape = 's32[1]{0}', space=sflag, size = 0x4, scoped, tag = 'scoped memory for tpu_custom_call.1']
    #allocation5 [shape = 'u8[4096]{0}', space=vmem, size = 0x1000, scoped, tag = 'input window, operand 1, single buffered']
    #allocation6 [shape = 's32[1]{0}', space=sflag, size = 0x4, scoped, tag = 'scoped memory for tpu_custom_call.1']
    #allocation7 [shape = 'u8[16384]{0}', space=vmem, size = 0x4000, scoped, tag = 'input window, operand 3, single buffered']
    #allocation8 [shape = 'u8[2048]{0}', space=vmem, size = 0x800, scoped, tag = 'output window, operand 0, single buffered']
    %10 = vsyncpa [#allocation3], 0
    %11 = vsyncpa [#allocation6], 0
    %12 = vsyncpa [#allocation4], 0
    // Predicated region
    $region2: #{tpu_custom_call.1} parent=1 // pred_check
      _
    $region3: #{tpu_custom_call.1} parent=1 // pred_check_branch
      %14 = sbr.rel (0) target = $region5
    $region4: #{tpu_custom_call.1} parent=1 // pred_region
      %s16 = ssub.s32 128, 128
      %17 = vsyncadd [#allocation3], %s16
      %s19 = sshll.u32 [#allocation2], 4
      %s20 = int_to_ptr.vmem [resolvable:$true] %s19
      %22 = dma.hbm_to_vmem [thread:$0]  %s0, 128, %s20, [#allocation3]
    $region5: #{tpu_custom_call.1} parent=1 // pred_fallthru
      _
    // Predicated region
    $region6: #{tpu_custom_call.1} parent=1 // pred_check
      _
    $region7: #{tpu_custom_call.1} parent=1 // pred_check_branch
      %24 = sbr.rel (0) target = $region9
    $region8: #{tpu_custom_call.1} parent=1 // pred_region
      %s26 = ssub.s32 128, 128
      %27 = vsyncadd [#allocation6], %s26
      %s28 = sshll.u32 [#allocation5], 4
      %s29 = int_to_ptr.vmem [resolvable:$true] %s28
      %34 = dma.hbm_to_vmem [thread:$0]  %s1, 128, %s29, [#allocation6], 64, 64, 4
    $region9: #{tpu_custom_call.1} parent=1 // pred_fallthru
      _
    // Predicated region
    $region10: #{tpu_custom_call.1} parent=1 // pred_check
      _
    $region11: #{tpu_custom_call.1} parent=1 // pred_check_branch
      %36 = sbr.rel (0) target = $region13
    $region12: #{tpu_custom_call.1} parent=1 // pred_region
      _
    $region13: #{tpu_custom_call.1} parent=1 // pred_fallthru
      _
    // Predicated region
    $region14: #{tpu_custom_call.1} parent=1 // pred_check
      _
    $region15: #{tpu_custom_call.1} parent=1 // pred_check_branch
      %38 = sbr.rel (0) target = $region17
    $region16: #{tpu_custom_call.1} parent=1 // pred_region
      %s40 = ssub.s32 512, 512
      %41 = vsyncadd [#allocation6], %s40
      %s42 = sshll.u32 [#allocation7], 4
      %s43 = int_to_ptr.vmem [resolvable:$true] %s42
      %48 = dma.hbm_to_vmem [thread:$0]  %s3, 512, %s43, [#allocation6], 64, 64, 4
    $region17: #{tpu_custom_call.1} parent=1 // pred_fallthru
      _
    // Predicated region
    $region18: #{tpu_custom_call.1} parent=1 // pred_check
      _
    $region19: #{tpu_custom_call.1} parent=1 // pred_check_branch
      %50 = sbr.rel (0) target = $region21
    $region20: #{tpu_custom_call.1} parent=1 // pred_region
      _
    $region21: #{tpu_custom_call.1} parent=1 // pred_fallthru
      _
    // Predicated region
    $region22: #{tpu_custom_call.1} parent=1 // pred_check
      _
    $region23: #{tpu_custom_call.1} parent=1 // pred_check_branch
      %52 = sbr.rel (0) target = $region25
    $region24: #{tpu_custom_call.1} parent=1 // pred_region
      %53 = dma.done [#allocation3], 128
    $region25: #{tpu_custom_call.1} parent=1 // pred_fallthru
      _
    // Predicated region
    $region26: #{tpu_custom_call.1} parent=1 // pred_check
      _
    $region27: #{tpu_custom_call.1} parent=1 // pred_check_branch
      %55 = sbr.rel (0) target = $region29
    $region28: #{tpu_custom_call.1} parent=1 // pred_region
      %56 = dma.done [#allocation6], 128
    $region29: #{tpu_custom_call.1} parent=1 // pred_fallthru
      _
    // Predicated region
    $region30: #{tpu_custom_call.1} parent=1 // pred_check
      _
    $region31: #{tpu_custom_call.1} parent=1 // pred_check_branch
      %58 = sbr.rel (0) target = $region33
    $region32: #{tpu_custom_call.1} parent=1 // pred_region
      %59 = dma.done [#allocation6], 512
    $region33: #{tpu_custom_call.1} parent=1 // pred_fallthru
      _
    %v61 = vld [vmem:[#allocation2] sm:$0xff]
    %v62 = vld [vmem:[#allocation5] sm:$0xf]
    %v63 = vld [vmem:[#allocation5 + $0x4] sm:$0xf]
    %v64 = vld [vmem:[%s2] sm:$0x1]
    %v65 = vpack.c.bf16 %v61, %v61
    %v67 = vlaneseq
    %v68 = vshrl.u32 %v67, 7
    %v69 = vsub.s32 0, %v68
    %v70 = vrot.slane %v64, %v69
    %v74 = vunpack.c.l.b16 %v62
    %v75 = vunpack.c.l.b16 %v63
    %v76 = vpack.c.b16 %v75, %v74
    %vm78 = vcmask 130048
    %v80 = vsel %vm78, %v65, 0
    %82 = vmatprep.subr.bf16.mxu0 0
    %83 = vmatpush1.bf16.msra.mxu0 %v76
    %84 = vmatprep.subr.bf16.mxu0 0
    %85 = vmatpush1.bf16.msra.mxu0 0
    %86 = vmatprep.subr.bf16.mxu0 0
    %87 = vmatpush1.bf16.msra.mxu0 0
    %88 = vmatprep.subr.bf16.mxu0 0
    %89 = vmatpush1.bf16.msra.mxu0 0
    %90 = vmatprep.subr.bf16.mxu0 0
    %91 = vmatpush1.bf16.msra.mxu0 0
    %92 = vmatprep.subr.bf16.mxu0 0
    %93 = vmatpush1.bf16.msra.mxu0 0
    %94 = vmatprep.subr.bf16.mxu0 0
    %95 = vmatpush1.bf16.msra.mxu0 0
    %96 = vmatprep.subr.bf16.mxu0 0
    %97 = vmatpush1.bf16.msra.mxu0 0
    %98 = vmatprep.subr.bf16.mxu0 0
    %99 = vmatpush1.bf16.msra.mxu0 0
    %100 = vmatprep.subr.bf16.mxu0 0
    %101 = vmatpush1.bf16.msra.mxu0 0
    %102 = vmatprep.subr.bf16.mxu0 0
    %103 = vmatpush1.bf16.msra.mxu0 0
    %104 = vmatprep.subr.bf16.mxu0 0
    %105 = vmatpush1.bf16.msra.mxu0 0
    %106 = vmatprep.subr.bf16.mxu0 0
    %107 = vmatpush1.bf16.msra.mxu0 0
    %108 = vmatprep.subr.bf16.mxu0 0
    %109 = vmatpush1.bf16.msra.mxu0 0
    %110 = vmatprep.subr.bf16.mxu0 0
    %111 = vmatpush1.bf16.msra.mxu0 0
    %112 = vmatprep.subr.bf16.mxu0 0
    %113 = vmatpush1.bf16.msra.mxu0 0
    %114 = vmatprep.mubr.bf16.mxu0 0
    %115 = vmatmul.mubr.bf16.gmra.mrb[0].mxu0 %v80
    %v116 = vpop.f32.mrb[0].mxu0
    %v117 = vadd.f32 %v70, %v116
    %v118 = vpop.f32.mrb[0].mxu0
    %v119 = vpop.f32.mrb[0].mxu0
    %v120 = vpop.f32.mrb[0].mxu0
    %121 = vdwg.mxu0
    %vm122 = vcmp.gt.f32.partialorder %v117, 0.0
    %v123 = vmul.f32 %v117, 0.01
    %v124 = vsel %vm122, %v117, %v123
    %v125 = vld [vmem:[#allocation7] sm:$0xf]
    %v126 = vld [vmem:[#allocation7 + $0x4] sm:$0xf]
    %v127 = vld [vmem:[#allocation7 + $0x8] sm:$0xf]
    %v128 = vld [vmem:[#allocation7 + $0xc] sm:$0xf]
    %v129 = vld [vmem:[#allocation7 + $0x10] sm:$0xf]
    %v130 = vld [vmem:[#allocation7 + $0x14] sm:$0xf]
    %v131 = vld [vmem:[#allocation7 + $0x18] sm:$0xf]
    %v132 = vld [vmem:[#allocation7 + $0x1c] sm:$0xf]
    %v133 = vld [vmem:[%s4] sm:$0x1]
    %v134 = vpack.c.bf16 %v124, %v124
    %v136 = vlaneseq
    %v137 = vshrl.u32 %v136, 7
    %v138 = vsub.s32 0, %v137
    %v139 = vrot.slane %v133, %v138
    %v149 = vunpack.c.l.b16 %v125
    %v150 = vunpack.c.l.b16 %v126
    %v151 = vunpack.c.l.b16 %v127
    %v152 = vunpack.c.l.b16 %v128
    %v153 = vunpack.c.l.b16 %v129
    %v154 = vunpack.c.l.b16 %v130
    %v155 = vunpack.c.l.b16 %v131
    %v156 = vunpack.c.l.b16 %v132
    %v157 = vpack.c.b16 %v150, %v149
    %v158 = vpack.c.b16 %v152, %v151
    %v159 = vpack.c.b16 %v154, %v153
    %v160 = vpack.c.b16 %v156, %v155
    %vm165 = vcmask 523264
    %v167 = vsel %vm165, %v134, 0
    %169 = vmatprep.subr.bf16.mxu0 0
    %170 = vmatpush1.bf16.msra.mxu0 %v157
    %171 = vmatprep.subr.bf16.mxu0 0
    %172 = vmatpush1.bf16.msra.mxu0 %v158
    %173 = vmatprep.subr.bf16.mxu0 0
    %174 = vmatpush1.bf16.msra.mxu0 %v159
    %175 = vmatprep.subr.bf16.mxu0 0
    %176 = vmatpush1.bf16.msra.mxu0 %v160
    %177 = vmatprep.subr.bf16.mxu0 0
    %178 = vmatpush1.bf16.msra.mxu0 0
    %179 = vmatprep.subr.bf16.mxu0 0
    %180 = vmatpush1.bf16.msra.mxu0 0
    %181 = vmatprep.subr.bf16.mxu0 0
    %182 = vmatpush1.bf16.msra.mxu0 0
    %183 = vmatprep.subr.bf16.mxu0 0
    %184 = vmatpush1.bf16.msra.mxu0 0
    %185 = vmatprep.subr.bf16.mxu0 0
    %186 = vmatpush1.bf16.msra.mxu0 0
    %187 = vmatprep.subr.bf16.mxu0 0
    %188 = vmatpush1.bf16.msra.mxu0 0
    %189 = vmatprep.subr.bf16.mxu0 0
    %190 = vmatpush1.bf16.msra.mxu0 0
    %191 = vmatprep.subr.bf16.mxu0 0
    %192 = vmatpush1.bf16.msra.mxu0 0
    %193 = vmatprep.subr.bf16.mxu0 0
    %194 = vmatpush1.bf16.msra.mxu0 0
    %195 = vmatprep.subr.bf16.mxu0 0
    %196 = vmatpush1.bf16.msra.mxu0 0
    %197 = vmatprep.subr.bf16.mxu0 0
    %198 = vmatpush1.bf16.msra.mxu0 0
    %199 = vmatprep.subr.bf16.mxu0 0
    %200 = vmatpush1.bf16.msra.mxu0 0
    %201 = vmatprep.mubr.bf16.mxu0 0
    %202 = vmatmul.mubr.bf16.gmra.mrb[0].mxu0 %v167
    %v203 = vpop.f32.mrb[0].mxu0
    %v204 = vadd.f32 %v139, %v203
    %v205 = vpop.f32.mrb[0].mxu0
    %v206 = vpop.f32.mrb[0].mxu0
    %v207 = vpop.f32.mrb[0].mxu0
    %208 = vdwg.mxu0
    %vm209 = vcmp.gt.f32.partialorder %v204, 0.0
    %v210 = vmul.f32 %v204, 0.01
    %v211 = vsel %vm209, %v204, %v210
    %v212 = vpack.c.bf16 %v211, %v211
    %vm213 = vcmask 519168
    %214 = vst.msk [vmem:[#allocation8] sm:$0xf] %vm213, %v212
    // Predicated region
    $region34: #{tpu_custom_call.1} parent=1 // pred_check
      _
    $region35: #{tpu_custom_call.1} parent=1 // pred_check_branch
      %216 = sbr.rel (0) target = $region37
    $region36: #{tpu_custom_call.1} parent=1 // pred_region
      %s218 = ssub.s32 64, 64
      %219 = vsyncadd [#allocation4], %s218
      %s221 = sshll.u32 [#allocation8], 4
      %s222 = int_to_ptr.vmem [resolvable:$true] %s221
      %224 = dma.vmem_to_hbm [thread:$0]  %s222, 64, %s5, [#allocation4]
    $region37: #{tpu_custom_call.1} parent=1 // pred_fallthru
      _
    // Predicated region
    $region38: #{tpu_custom_call.1} parent=1 // pred_check
      _
    $region39: #{tpu_custom_call.1} parent=1 // pred_check_branch
      %226 = sbr.rel (0) target = $region41
    $region40: #{tpu_custom_call.1} parent=1 // pred_region
      %227 = dma.done [#allocation4], 64
    $region41: #{tpu_custom_call.1} parent=1 // pred_fallthru
      _
    %228 = vsyncpa [#allocation3], 1
    %229 = vsyncpa [#allocation6], 1
    %230 = vsyncpa [#allocation4], 1

</llo_original>
